<compile_context>
chip_gen: v6e
topology: v6e:2x2x1
jax: 0.10.0
libtpu: 0.0.40
codegen_flags: <defaults>
</compile_context>

<pallas_src>
import jax
import jax.numpy as jnp
from jax.experimental import pallas as pl
from jax.experimental.pallas import tpu as pltpu


# ----------------------------------------------------------------------------
# Host-side parameter lowering
# ----------------------------------------------------------------------------
def _conv_to_banded(w, scale, L):
    """Lower Conv1d(stride=1, padding=K//2) + per-channel BN scale to a matmul.

    w:     (Cout, Cin, K)  PyTorch conv weight
    scale: (Cout,)         folded BN scale = gamma / sqrt(var + eps)
    Returns B of shape (Cin*L, Cout*L) such that, for x_flat[n, cin*L + j],
      (x_flat @ B)[n, cout*L + l] == scale[cout] * Conv1d(x)[n, cout, l]
    (zero padding is folded into the band structure).
    """
    Cout, Cin, K = w.shape
    P = K // 2  # odd K => Lout == L
    w_eff = w * scale[:, None, None]
    j = jnp.arange(L)[:, None]            # input position
    l = jnp.arange(L)[None, :]            # output position
    tap = j - l + P                       # which conv tap connects j -> l
    valid = (tap >= 0) & (tap < K)
    tap_c = jnp.clip(tap, 0, K - 1)
    w_t = jnp.transpose(w_eff, (1, 0, 2))                    # (Cin, Cout, K)
    band = w_t[:, :, tap_c] * valid[None, None].astype(w.dtype)  # (Cin,Cout,L,L)
    return jnp.transpose(band, (0, 2, 1, 3)).reshape(Cin * L, Cout * L)


def _pool_selectors(C, L):
    """0/1 matrices selecting even/odd positions per channel in flat layout."""
    Lh = L // 2
    rows = jnp.arange(C * L)
    cols = jnp.arange(C * Lh)
    r_c, r_pos = rows[:, None] // L, rows[:, None] % L
    c_c, c_pos = cols[None, :] // Lh, cols[None, :] % Lh
    same = r_c == c_c
    s_even = (same & (r_pos == 2 * c_pos)).astype(jnp.float32)
    s_odd = (same & (r_pos == 2 * c_pos + 1)).astype(jnp.float32)
    return s_even, s_odd


def init_params(settings, L_in, key):
    """Build the fused-kernel operand list ('steps') and raw params (for ref)."""
    eps = 1e-5
    steps, raw_layers = [], []
    in_ch, ksize, L = 1, 21, L_in
    for spec in settings["ConvLayers"]:
        if spec == "M":
            ksize -= 4
            s_even, s_odd = _pool_selectors(in_ch, L)
            steps.append(("pool", s_even, s_odd))
            raw_layers.append({"type": "pool"})
            L = L // 2
            continue
        cout = spec
        key, kw, kb, kg, kbe, km, kv = jax.random.split(key, 7)
        w = 0.1 * jax.random.normal(kw, (cout, in_ch, ksize), jnp.float32)
        b = 0.1 * jax.random.normal(kb, (cout,), jnp.float32)
        gamma = 1.0 + 0.1 * jax.random.normal(kg, (cout,), jnp.float32)
        beta = 0.1 * jax.random.normal(kbe, (cout,), jnp.float32)
        rmean = 0.1 * jax.random.normal(km, (cout,), jnp.float32)
        rvar = jnp.abs(jax.random.normal(kv, (cout,), jnp.float32)) + 0.5
        scale = gamma / jnp.sqrt(rvar + eps)
        shift = beta + (b - rmean) * scale                   # bias + BN fold
        B = _conv_to_banded(w, scale, L)                     # scale folded in
        shift_flat = jnp.repeat(shift, L).reshape(1, cout * L)
        steps.append(("conv", B, shift_flat))
        raw_layers.append({"type": "conv", "w": w, "b": b, "gamma": gamma,
                           "beta": beta, "mean": rmean, "var": rvar})
        in_ch = cout

    D, C = settings["linear_dim"], settings["class_num"]
    assert D == in_ch * L, "linear_dim inconsistent with conv stack / input L"
    key, kw, kb = jax.random.split(key, 3)
    head_w = 0.1 * jax.random.normal(kw, (C, D), jnp.float32)  # PyTorch (out,in)
    head_b = 0.1 * jax.random.normal(kb, (C,), jnp.float32)
    steps.append(("head", head_w.T, head_b.reshape(1, C)))
    raw_head = {"w": head_w, "b": head_b}
    return steps, raw_layers, raw_head


# ----------------------------------------------------------------------------
# Fused forward kernel
# ----------------------------------------------------------------------------
def _make_fused_kernel(kinds):
    def kernel(*refs):
        x_ref, o_ref = refs[0], refs[-1]
        ops = refs[1:-1]
        h = x_ref[...]                                        # (N, Cin*L) f32
        i = 0
        for kind in kinds:
            a = ops[i][...]
            b = ops[i + 1][...]
            i += 2
            if kind == "conv":        # banded conv + folded BN + ReLU
                h = jnp.maximum(
                    jnp.dot(h, a, preferred_element_type=jnp.float32) + b, 0.0)
            elif kind == "pool":      # MaxPool1d(2,2) via 0/1 selection matmuls
                h = jnp.maximum(
                    jnp.dot(h, a, preferred_element_type=jnp.float32),
                    jnp.dot(h, b, preferred_element_type=jnp.float32))
            else:                     # head: Linear + LogSoftmax
                logits = jnp.dot(h, a, preferred_element_type=jnp.float32) + b
                z = logits - jnp.max(logits, axis=-1, keepdims=True)
                lse = jnp.log(jnp.sum(jnp.exp(z), axis=-1, keepdims=True))
                h = z - lse
        o_ref[...] = h.astype(o_ref.dtype)

    return kernel


def lenet_forward(x, steps):
    """x: (N, Cin, L) float32 (Cin=1 for LeNet)."""
    N, Cin, L = x.shape
    x2 = x.reshape(N, Cin * L)                 # flatten matches banded layout
    kinds, operands = [], []
    for st in steps:
        kinds.append(st[0])
        operands.extend(st[1:])
    C = operands[-1].shape[1]                  # class_num (head bias width)
    return pl.pallas_call(
        _make_fused_kernel(tuple(kinds)),
        out_shape=jax.ShapeDtypeStruct((N, C), jnp.float32),
        grid=(1,),
        in_specs=[pl.BlockSpec(a.shape, lambda i: (0, 0))
                  for a in [x2, *operands]],
        out_specs=pl.BlockSpec((N, C), lambda i: (0, 0)),
        compiler_params=pltpu.CompilerParams(
            dimension_semantics=("arbitrary",)),
    )(x2, *operands)


# ----------------------------------------------------------------------------
# Pure-JAX reference (un-folded parameters) for correctness checking
# ----------------------------------------------------------------------------
def reference_forward(x, raw_layers, raw_head):
    eps = 1e-5
    h = x
    for lyr in raw_layers:
        if lyr["type"] == "pool":
            Nn, Cc, Ll = h.shape
            Lh = Ll // 2
            h = jnp.max(h[:, :, :Lh * 2].reshape(Nn, Cc, Lh, 2), axis=-1)
        else:
            w, b = lyr["w"], lyr["b"]
            P = w.shape[-1] // 2
            h = jax.lax.conv_general_dilated(
                h, w, window_strides=(1,), padding=[(P, P)],
                dimension_numbers=("NCH", "OIH", "NCH"))
            h = h + b[None, :, None]
            scale = lyr["gamma"] / jnp.sqrt(lyr["var"] + eps)
            h = (h - lyr["mean"][None, :, None]) * scale[None, :, None] \
                + lyr["beta"][None, :, None]
            h = jnp.maximum(h, 0.0)
    h = h.reshape(h.shape[0], -1)
    logits = h @ raw_head["w"].T + raw_head["b"]
    return jax.nn.log_softmax(logits, axis=-1)


if __name__ == "__main__":
    # Config consistent with the module:
    #   ConvLayers [4, 'M', 8]: Conv(1->4,k=21,p=10) BN ReLU, MaxPool(2,2),
    #                           Conv(4->8,k=17,p=8)  BN ReLU
    #   input length 32 -> flatten dim 8 * 16 = 128 = linear_dim
    settings = {"ConvLayers": [4, "M", 8], "class_num": 10, "linear_dim": 128}
    N, L = 2, 32

    key = jax.random.PRNGKey(0)
    key, kx = jax.random.split(key)
    x = jax.random.normal(kx, (N, 1, L), jnp.float32)

    steps, raw_layers, raw_head = init_params(settings, L, key)

    out = lenet_forward(x, steps)
    out = jax.block_until_ready(out)

    assert out.shape == (N, settings["class_num"])
    # log-softmax rows must sum to 1 in probability space
    assert bool(jnp.all(jnp.abs(jnp.sum(jnp.exp(out), axis=1) - 1.0) < 1e-4))
    # match the un-folded pure-JAX reference
    ref = reference_forward(x, raw_layers, raw_head)
    assert bool(jnp.max(jnp.abs(out - ref)) < 1e-3)
    print("KERNEL_OK")
</pallas_src>

<mosaic_0001>
module attributes {stable_mosaic.version = 11 : i64} {
  func.func @kernel(%arg0: i32, %arg1: memref<2x32xf32, #tpu.memory_space<vmem>>, %arg2: memref<32x128xf32, #tpu.memory_space<vmem>>, %arg3: memref<1x128xf32, #tpu.memory_space<vmem>>, %arg4: memref<128x64xf32, #tpu.memory_space<vmem>>, %arg5: memref<128x64xf32, #tpu.memory_space<vmem>>, %arg6: memref<64x128xf32, #tpu.memory_space<vmem>>, %arg7: memref<1x128xf32, #tpu.memory_space<vmem>>, %arg8: memref<128x10xf32, #tpu.memory_space<vmem>>, %arg9: memref<1x10xf32, #tpu.memory_space<vmem>>, %arg10: memref<2x10xf32, #tpu.memory_space<vmem>>) attributes {dimension_semantics = [#tpu.dimension_semantics<arbitrary>], iteration_bounds = array<i64: 1>, scalar_prefetch = 0 : i64, scratch_operands = 0 : i64, tpu.core_type = #tpu.core_type<tc>, window_params = [{pipeline_mode = #tpu.pipeline_mode<synchronous>, transform_indices = @transform_0, window_bounds = array<i64: 2, 32>}, {pipeline_mode = #tpu.pipeline_mode<synchronous>, transform_indices = @transform_1, window_bounds = array<i64: 32, 128>}, {pipeline_mode = #tpu.pipeline_mode<synchronous>, transform_indices = @transform_2, window_bounds = array<i64: 1, 128>}, {pipeline_mode = #tpu.pipeline_mode<synchronous>, transform_indices = @transform_3, window_bounds = array<i64: 128, 64>}, {pipeline_mode = #tpu.pipeline_mode<synchronous>, transform_indices = @transform_4, window_bounds = array<i64: 128, 64>}, {pipeline_mode = #tpu.pipeline_mode<synchronous>, transform_indices = @transform_5, window_bounds = array<i64: 64, 128>}, {pipeline_mode = #tpu.pipeline_mode<synchronous>, transform_indices = @transform_6, window_bounds = array<i64: 1, 128>}, {pipeline_mode = #tpu.pipeline_mode<synchronous>, transform_indices = @transform_7, window_bounds = array<i64: 128, 10>}, {pipeline_mode = #tpu.pipeline_mode<synchronous>, transform_indices = @transform_8, window_bounds = array<i64: 1, 10>}, {pipeline_mode = #tpu.pipeline_mode<synchronous>, transform_indices = @transform_9, window_bounds = array<i64: 2, 10>}]} {
    %c0 = arith.constant 0 : index
    %c0_0 = arith.constant 0 : index
    %0 = vector.load %arg1[%c0, %c0_0] : memref<2x32xf32, #tpu.memory_space<vmem>>, vector<2x32xf32>
    %c0_1 = arith.constant 0 : index
    %c0_2 = arith.constant 0 : index
    %1 = vector.load %arg2[%c0_1, %c0_2] : memref<32x128xf32, #tpu.memory_space<vmem>>, vector<32x128xf32>
    %c0_3 = arith.constant 0 : index
    %c0_4 = arith.constant 0 : index
    %2 = vector.load %arg3[%c0_3, %c0_4] : memref<1x128xf32, #tpu.memory_space<vmem>>, vector<1x128xf32>
    %cst = arith.constant dense<0.000000e+00> : vector<2x128xf32>
    %3 = tpu.matmul %0, %1, %cst {dimension_numbers = #tpu.dot_dimension_numbers<[1], [0], [0], [1], [0, 0, 1, 1], [], []>} : vector<2x32xf32>, vector<32x128xf32>, vector<2x128xf32> -> vector<2x128xf32>
    %4 = vector.broadcast %2 : vector<1x128xf32> to vector<2x128xf32>
    %5 = arith.addf %3, %4 : vector<2x128xf32>
    %cst_5 = arith.constant 0.000000e+00 : f32
    %6 = vector.broadcast %cst_5 : f32 to vector<2x128xf32>
    %7 = arith.maximumf %5, %6 : vector<2x128xf32>
    %c0_6 = arith.constant 0 : index
    %c0_7 = arith.constant 0 : index
    %8 = vector.load %arg4[%c0_6, %c0_7] : memref<128x64xf32, #tpu.memory_space<vmem>>, vector<128x64xf32>
    %c0_8 = arith.constant 0 : index
    %c0_9 = arith.constant 0 : index
    %9 = vector.load %arg5[%c0_8, %c0_9] : memref<128x64xf32, #tpu.memory_space<vmem>>, vector<128x64xf32>
    %cst_10 = arith.constant dense<0.000000e+00> : vector<2x64xf32>
    %10 = tpu.matmul %7, %8, %cst_10 {dimension_numbers = #tpu.dot_dimension_numbers<[1], [0], [0], [1], [0, 0, 1, 1], [], []>} : vector<2x128xf32>, vector<128x64xf32>, vector<2x64xf32> -> vector<2x64xf32>
    %cst_11 = arith.constant dense<0.000000e+00> : vector<2x64xf32>
    %11 = tpu.matmul %7, %9, %cst_11 {dimension_numbers = #tpu.dot_dimension_numbers<[1], [0], [0], [1], [0, 0, 1, 1], [], []>} : vector<2x128xf32>, vector<128x64xf32>, vector<2x64xf32> -> vector<2x64xf32>
    %12 = arith.maximumf %10, %11 : vector<2x64xf32>
    %c0_12 = arith.constant 0 : index
    %c0_13 = arith.constant 0 : index
    %13 = vector.load %arg6[%c0_12, %c0_13] : memref<64x128xf32, #tpu.memory_space<vmem>>, vector<64x128xf32>
    %c0_14 = arith.constant 0 : index
    %c0_15 = arith.constant 0 : index
    %14 = vector.load %arg7[%c0_14, %c0_15] : memref<1x128xf32, #tpu.memory_space<vmem>>, vector<1x128xf32>
    %cst_16 = arith.constant dense<0.000000e+00> : vector<2x128xf32>
    %15 = tpu.matmul %12, %13, %cst_16 {dimension_numbers = #tpu.dot_dimension_numbers<[1], [0], [0], [1], [0, 0, 1, 1], [], []>} : vector<2x64xf32>, vector<64x128xf32>, vector<2x128xf32> -> vector<2x128xf32>
    %16 = vector.broadcast %14 : vector<1x128xf32> to vector<2x128xf32>
    %17 = arith.addf %15, %16 : vector<2x128xf32>
    %cst_17 = arith.constant 0.000000e+00 : f32
    %18 = vector.broadcast %cst_17 : f32 to vector<2x128xf32>
    %19 = arith.maximumf %17, %18 : vector<2x128xf32>
    %c0_18 = arith.constant 0 : index
    %c0_19 = arith.constant 0 : index
    %20 = vector.load %arg8[%c0_18, %c0_19] : memref<128x10xf32, #tpu.memory_space<vmem>>, vector<128x10xf32>
    %c0_20 = arith.constant 0 : index
    %c0_21 = arith.constant 0 : index
    %21 = vector.load %arg9[%c0_20, %c0_21] : memref<1x10xf32, #tpu.memory_space<vmem>>, vector<1x10xf32>
    %cst_22 = arith.constant dense<0.000000e+00> : vector<2x10xf32>
    %22 = tpu.matmul %19, %20, %cst_22 {dimension_numbers = #tpu.dot_dimension_numbers<[1], [0], [0], [1], [0, 0, 1, 1], [], []>} : vector<2x128xf32>, vector<128x10xf32>, vector<2x10xf32> -> vector<2x10xf32>
    %23 = vector.broadcast %21 : vector<1x10xf32> to vector<2x10xf32>
    %24 = arith.addf %22, %23 : vector<2x10xf32>
    %cst_23 = arith.constant dense<0xFF800000> : vector<2xf32>
    %25 = vector.multi_reduction <maximumf>, %24, %cst_23 [1] : vector<2x10xf32> to vector<2xf32>
    %26 = vector.shape_cast %25 : vector<2xf32> to vector<2x1xf32>
    %27 = vector.broadcast %26 : vector<2x1xf32> to vector<2x10xf32>
    %28 = arith.subf %24, %27 : vector<2x10xf32>
    %29 = math.exp %28 : vector<2x10xf32>
    %cst_24 = arith.constant dense<0.000000e+00> : vector<2xf32>
    %30 = vector.multi_reduction <add>, %29, %cst_24 [1] : vector<2x10xf32> to vector<2xf32>
    %31 = vector.shape_cast %30 : vector<2xf32> to vector<2x1xf32>
    %32 = math.log %31 : vector<2x1xf32>
    %33 = vector.broadcast %32 : vector<2x1xf32> to vector<2x10xf32>
    %34 = arith.subf %28, %33 : vector<2x10xf32>
    %c0_25 = arith.constant 0 : index
    %c0_26 = arith.constant 0 : index
    %35 = vector.load %arg10[%c0_25, %c0_26] : memref<2x10xf32, #tpu.memory_space<vmem>>, vector<2x10xf32>
    tpu.vector_store %arg10[%c0_25, %c0_26], %34 {strides = array<i32>} : memref<2x10xf32, #tpu.memory_space<vmem>>, vector<2x10xf32>,
    return
  }
  func.func @transform_0(%arg0: i32) -> (i32, i32) {
    %c0_i32 = arith.constant 0 : i32
    %c0_i32_0 = arith.constant 0 : i32
    %c0_i32_1 = arith.constant 0 : i32
    return %c0_i32, %c0_i32_0 : i32, i32
  }
  func.func @transform_1(%arg0: i32) -> (i32, i32) {
    %c0_i32 = arith.constant 0 : i32
    %c0_i32_0 = arith.constant 0 : i32
    %c0_i32_1 = arith.constant 0 : i32
    return %c0_i32, %c0_i32_0 : i32, i32
  }
  func.func @transform_2(%arg0: i32) -> (i32, i32) {
    %c0_i32 = arith.constant 0 : i32
    %c0_i32_0 = arith.constant 0 : i32
    %c0_i32_1 = arith.constant 0 : i32
    return %c0_i32, %c0_i32_0 : i32, i32
  }
  func.func @transform_3(%arg0: i32) -> (i32, i32) {
    %c0_i32 = arith.constant 0 : i32
    %c0_i32_0 = arith.constant 0 : i32
    %c0_i32_1 = arith.constant 0 : i32
    return %c0_i32, %c0_i32_0 : i32, i32
  }
  func.func @transform_4(%arg0: i32) -> (i32, i32) {
    %c0_i32 = arith.constant 0 : i32
    %c0_i32_0 = arith.constant 0 : i32
    %c0_i32_1 = arith.constant 0 : i32
    return %c0_i32, %c0_i32_0 : i32, i32
  }
  func.func @transform_5(%arg0: i32) -> (i32, i32) {
    %c0_i32 = arith.constant 0 : i32
    %c0_i32_0 = arith.constant 0 : i32
    %c0_i32_1 = arith.constant 0 : i32
    return %c0_i32, %c0_i32_0 : i32, i32
  }
  func.func @transform_6(%arg0: i32) -> (i32, i32) {
    %c0_i32 = arith.constant 0 : i32
    %c0_i32_0 = arith.constant 0 : i32
    %c0_i32_1 = arith.constant 0 : i32
    return %c0_i32, %c0_i32_0 : i32, i32
  }
  func.func @transform_7(%arg0: i32) -> (i32, i32) {
    %c0_i32 = arith.constant 0 : i32
    %c0_i32_0 = arith.constant 0 : i32
    %c0_i32_1 = arith.constant 0 : i32
    return %c0_i32, %c0_i32_0 : i32, i32
  }
  func.func @transform_8(%arg0: i32) -> (i32, i32) {
    %c0_i32 = arith.constant 0 : i32
    %c0_i32_0 = arith.constant 0 : i32
    %c0_i32_1 = arith.constant 0 : i32
    return %c0_i32, %c0_i32_0 : i32, i32
  }
  func.func @transform_9(%arg0: i32) -> (i32, i32) {
    %c0_i32 = arith.constant 0 : i32
    %c0_i32_0 = arith.constant 0 : i32
    %c0_i32_1 = arith.constant 0 : i32
    return %c0_i32, %c0_i32_0 : i32, i32
  }
}

</mosaic_0001>

<llo_original>
// kernel: tpu_custom_call.1
$region0: #{tpu_custom_call.1}
  #allocation0 [shape = 'u32[]', space=smem, size = 0x4, offset = 0x4, fixed_abs, tag = 'smem constant byte address 0x4 - core index']
  #allocation1 [shape = 'u32[144,128]{1,0:T(1,128)}', space=vmem, size = 0x12000, scoped, tag = 'internal scratch']
  %s0 = inlined_call_operand.vmem [shape: f32[2,32], index: 0, kind: input, shape index: {}]
  %s1 = inlined_call_operand.vmem [shape: f32[32,128], index: 1, kind: input, shape index: {}]
  %s2 = inlined_call_operand.vmem [shape: f32[1,128], index: 2, kind: input, shape index: {}]
  %s3 = inlined_call_operand.vmem [shape: f32[128,64], index: 3, kind: input, shape index: {}]
  %s4 = inlined_call_operand.vmem [shape: f32[128,64], index: 4, kind: input, shape index: {}]
  %s5 = inlined_call_operand.vmem [shape: f32[64,128], index: 5, kind: input, shape index: {}]
  %s6 = inlined_call_operand.vmem [shape: f32[1,128], index: 6, kind: input, shape index: {}]
  %s7 = inlined_call_operand.vmem [shape: f32[128,10], index: 7, kind: input, shape index: {}]
  %s8 = inlined_call_operand.vmem [shape: f32[1,10], index: 8, kind: input, shape index: {}]
  %s9 = inlined_call_operand.hbm [shape: f32[2,10], index: 9, kind: output, shape index: {}]
  %s10 = sld [smem:[#allocation0]]
  $region46: #{tpu_custom_call.1} parent=0
    _
  %s12 = ssub.s32 1, %s10
  %s13 = scalar_select 0, %s12, %s10
  $region1: #{tpu_custom_call.1} parent=0
    #allocation2 [shape = 'u8[1024]{0}', space=vmem, size = 0x400, scoped, tag = 'output window, operand 0, single buffered']
    #allocation3 [shape = 's32[1]{0}', space=sflag, size = 0x4, scoped, tag = 'scoped memory for tpu_custom_call.1']
    %14 = vsyncpa [#allocation3], 0
    // Predicated region
    $region2: #{tpu_custom_call.1} parent=1 // pred_check
      _
    $region3: #{tpu_custom_call.1} parent=1 // pred_check_branch
      %16 = sbr.rel (0) target = $region5
    $region4: #{tpu_custom_call.1} parent=1 // pred_region
      _
    $region5: #{tpu_custom_call.1} parent=1 // pred_fallthru
      _
    // Predicated region
    $region6: #{tpu_custom_call.1} parent=1 // pred_check
      _
    $region7: #{tpu_custom_call.1} parent=1 // pred_check_branch
      %18 = sbr.rel (0) target = $region9
    $region8: #{tpu_custom_call.1} parent=1 // pred_region
      _
    $region9: #{tpu_custom_call.1} parent=1 // pred_fallthru
      _
    // Predicated region
    $region10: #{tpu_custom_call.1} parent=1 // pred_check
      _
    $region11: #{tpu_custom_call.1} parent=1 // pred_check_branch
      %20 = sbr.rel (0) target = $region13
    $region12: #{tpu_custom_call.1} parent=1 // pred_region
      _
    $region13: #{tpu_custom_call.1} parent=1 // pred_fallthru
      _
    // Predicated region
    $region14: #{tpu_custom_call.1} parent=1 // pred_check
      _
    $region15: #{tpu_custom_call.1} parent=1 // pred_check_branch
      %22 = sbr.rel (0) target = $region17
    $region16: #{tpu_custom_call.1} parent=1 // pred_region
      _
    $region17: #{tpu_custom_call.1} parent=1 // pred_fallthru
      _
    // Predicated region
    $region18: #{tpu_custom_call.1} parent=1 // pred_check
      _
    $region19: #{tpu_custom_call.1} parent=1 // pred_check_branch
      %24 = sbr.rel (0) target = $region21
    $region20: #{tpu_custom_call.1} parent=1 // pred_region
      _
    $region21: #{tpu_custom_call.1} parent=1 // pred_fallthru
      _
    // Predicated region
    $region22: #{tpu_custom_call.1} parent=1 // pred_check
      _
    $region23: #{tpu_custom_call.1} parent=1 // pred_check_branch
      %26 = sbr.rel (0) target = $region25
    $region24: #{tpu_custom_call.1} parent=1 // pred_region
      _
    $region25: #{tpu_custom_call.1} parent=1 // pred_fallthru
      _
    // Predicated region
    $region26: #{tpu_custom_call.1} parent=1 // pred_check
      _
    $region27: #{tpu_custom_call.1} parent=1 // pred_check_branch
      %28 = sbr.rel (0) target = $region29
    $region28: #{tpu_custom_call.1} parent=1 // pred_region
      _
    $region29: #{tpu_custom_call.1} parent=1 // pred_fallthru
      _
    // Predicated region
    $region30: #{tpu_custom_call.1} parent=1 // pred_check
      _
    $region31: #{tpu_custom_call.1} parent=1 // pred_check_branch
      %30 = sbr.rel (0) target = $region33
    $region32: #{tpu_custom_call.1} parent=1 // pred_region
      _
    $region33: #{tpu_custom_call.1} parent=1 // pred_fallthru
      _
    // Predicated region
    $region34: #{tpu_custom_call.1} parent=1 // pred_check
      _
    $region35: #{tpu_custom_call.1} parent=1 // pred_check_branch
      %32 = sbr.rel (0) target = $region37
    $region36: #{tpu_custom_call.1} parent=1 // pred_region
      _
    $region37: #{tpu_custom_call.1} parent=1 // pred_fallthru
      _
    %v33 = vld [vmem:[%s0] sm:$0x3]
    %v34 = vld [vmem:[%s1] sm:$0xff]
    %v35 = vld [vmem:[%s1 + $0x8] sm:$0xff]
    %v36 = vld [vmem:[%s1 + $0x10] sm:$0xff]
    %v37 = vld [vmem:[%s1 + $0x18] sm:$0xff]
    %v38 = vld [vmem:[%s2] sm:$0x1]
    %v40 = vlaneseq
    %v41 = vshrl.u32 %v40, 7
    %v42 = vsub.s32 0, %v41
    %v43 = vrot.slane %v38, %v42
    %vm45 = vcmask 261120
    %v47 = vsel %vm45, %v33, 0
    %49 = vmatprep.subr.mxu0 0.0
    %50 = vmatpush1.msra.mxu0 0.0
    %51 = vmatprep.subr.mxu0 0.0
    %52 = vmatpush1.msra.mxu0 0.0
    %53 = vmatprep.subr.mxu0 0.0
    %54 = vmatpush1.msra.mxu0 0.0
    %55 = vmatprep.subr.mxu0 0.0
    %56 = vmatpush1.msra.mxu0 0.0
    %57 = vmatprep.subr.mxu0 0.0
    %58 = vmatpush1.msra.mxu0 0.0
    %59 = vmatprep.subr.mxu0 0.0
    %60 = vmatpush1.msra.mxu0 0.0
    %61 = vmatprep.subr.mxu0 0.0
    %62 = vmatpush1.msra.mxu0 0.0
    %63 = vmatprep.subr.mxu0 0.0
    %64 = vmatpush1.msra.mxu0 0.0
    %65 = vmatprep.subr.mxu0 0.0
    %66 = vmatpush1.msra.mxu0 0.0
    %67 = vmatprep.subr.mxu0 0.0
    %68 = vmatpush1.msra.mxu0 0.0
    %69 = vmatprep.subr.mxu0 0.0
    %70 = vmatpush1.msra.mxu0 0.0
    %71 = vmatprep.subr.mxu0 0.0
    %72 = vmatpush1.msra.mxu0 0.0
    %73 = vmatprep.subr.mxu0 0.0
    %74 = vmatpush1.msra.mxu0 %v37
    %75 = vmatprep.subr.mxu0 0.0
    %76 = vmatpush1.msra.mxu0 %v36
    %77 = vmatprep.subr.mxu0 0.0
    %78 = vmatpush1.msra.mxu0 %v35
    %79 = vmatprep.subr.mxu0 0.0
    %80 = vmatpush1.msra.mxu0 %v34
    %81 = vmatprep.subr.mxu0 0.0
    %82 = vmatpush2.msra.mxu0 0.0
    %83 = vmatprep.subr.mxu0 0.0
    %84 = vmatpush2.msra.mxu0 0.0
    %85 = vmatprep.subr.mxu0 0.0
    %86 = vmatpush2.msra.mxu0 0.0
    %87 = vmatprep.subr.mxu0 0.0
    %88 = vmatpush2.msra.mxu0 0.0
    %89 = vmatprep.subr.mxu0 0.0
    %90 = vmatpush2.msra.mxu0 0.0
    %91 = vmatprep.subr.mxu0 0.0
    %92 = vmatpush2.msra.mxu0 0.0
    %93 = vmatprep.subr.mxu0 0.0
    %94 = vmatpush2.msra.mxu0 0.0
    %95 = vmatprep.subr.mxu0 0.0
    %96 = vmatpush2.msra.mxu0 0.0
    %97 = vmatprep.subr.mxu0 0.0
    %98 = vmatpush2.msra.mxu0 0.0
    %99 = vmatprep.subr.mxu0 0.0
    %100 = vmatpush2.msra.mxu0 0.0
    %101 = vmatprep.subr.mxu0 0.0
    %102 = vmatpush2.msra.mxu0 0.0
    %103 = vmatprep.subr.mxu0 0.0
    %104 = vmatpush2.msra.mxu0 0.0
    %105 = vmatprep.subr.mxu0 0.0
    %106 = vmatpush2.msra.mxu0 0.0
    %107 = vmatprep.subr.mxu0 0.0
    %108 = vmatpush2.msra.mxu0 0.0
    %109 = vmatprep.subr.mxu0 0.0
    %110 = vmatpush2.msra.mxu0 0.0
    %111 = vmatprep.subr.mxu0 0.0
    %112 = vmatpush2.msra.mxu0 0.0
    %113 = vmatprep.mubr.f32.mxu0 0.0
    %114 = vmatmul.mubr.f32.gmra.mxu0 %v47
    %v115 = vpop.f32.mrf.mxu0
    %v116 = vadd.f32 %v43, %v115
    %v117 = vpop.f32.mrf.mxu0
    %118 = vdwg.mxu0
    %v119 = vmax.f32 %v116, 0.0
    %v120 = vld [vmem:[%s3] sm:$0xff]
    %v121 = vld [vmem:[%s3 + $0x8] sm:$0xff]
    %v122 = vld [vmem:[%s3 + $0x10] sm:$0xff]
    %v123 = vld [vmem:[%s3 + $0x18] sm:$0xff]
    %v124 = vld [vmem:[%s3 + $0x20] sm:$0xff]
    %v125 = vld [vmem:[%s3 + $0x28] sm:$0xff]
    %v126 = vld [vmem:[%s3 + $0x30] sm:$0xff]
    %v127 = vld [vmem:[%s3 + $0x38] sm:$0xff]
    %v128 = vld [vmem:[%s3 + $0x40] sm:$0xff]
    %v129 = vld [vmem:[%s3 + $0x48] sm:$0xff]
    %v130 = vld [vmem:[%s3 + $0x50] sm:$0xff]
    %v131 = vld [vmem:[%s3 + $0x58] sm:$0xff]
    %v132 = vld [vmem:[%s3 + $0x60] sm:$0xff]
    %v133 = vld [vmem:[%s3 + $0x68] sm:$0xff]
    %v134 = vld [vmem:[%s3 + $0x70] sm:$0xff]
    %v135 = vld [vmem:[%s3 + $0x78] sm:$0xff]
    %v136 = vld [vmem:[%s4] sm:$0xff]
    %v137 = vld [vmem:[%s4 + $0x8] sm:$0xff]
    %v138 = vld [vmem:[%s4 + $0x10] sm:$0xff]
    %v139 = vld [vmem:[%s4 + $0x18] sm:$0xff]
    %v140 = vld [vmem:[%s4 + $0x20] sm:$0xff]
    %v141 = vld [vmem:[%s4 + $0x28] sm:$0xff]
    %v142 = vld [vmem:[%s4 + $0x30] sm:$0xff]
    %v143 = vld [vmem:[%s4 + $0x38] sm:$0xff]
    %v144 = vld [vmem:[%s4 + $0x40] sm:$0xff]
    %v145 = vld [vmem:[%s4 + $0x48] sm:$0xff]
    %v146 = vld [vmem:[%s4 + $0x50] sm:$0xff]
    %v147 = vld [vmem:[%s4 + $0x58] sm:$0xff]
    %v148 = vld [vmem:[%s4 + $0x60] sm:$0xff]
    %v149 = vld [vmem:[%s4 + $0x68] sm:$0xff]
    %v150 = vld [vmem:[%s4 + $0x70] sm:$0xff]
    %v151 = vld [vmem:[%s4 + $0x78] sm:$0xff]
    %152 = vmatprep.subr.mxu0 0.0
    %153 = vmatpush1.msra.mxu0 %v135
    %154 = vmatprep.subr.mxu0 0.0
    %155 = vmatpush1.msra.mxu0 %v134
    %156 = vmatprep.subr.mxu0 0.0
    %157 = vmatpush1.msra.mxu0 %v133
    %158 = vmatprep.subr.mxu0 0.0
    %159 = vmatpush1.msra.mxu0 %v132
    %160 = vmatprep.subr.mxu0 0.0
    %161 = vmatpush1.msra.mxu0 %v131
    %162 = vmatprep.subr.mxu0 0.0
    %163 = vmatpush1.msra.mxu0 %v130
    %164 = vmatprep.subr.mxu0 0.0
    %165 = vmatpush1.msra.mxu0 %v129
    %166 = vmatprep.subr.mxu0 0.0
    %167 = vmatpush1.msra.mxu0 %v128
    %168 = vmatprep.subr.mxu0 0.0
    %169 = vmatpush1.msra.mxu0 %v127
    %170 = vmatprep.subr.mxu0 0.0
    %171 = vmatpush1.msra.mxu0 %v126
    %172 = vmatprep.subr.mxu0 0.0
    %173 = vmatpush1.msra.mxu0 %v125
    %174 = vmatprep.subr.mxu0 0.0
    %175 = vmatpush1.msra.mxu0 %v124
    %176 = vmatprep.subr.mxu0 0.0
    %177 = vmatpush1.msra.mxu0 %v123
    %178 = vmatprep.subr.mxu0 0.0
    %179 = vmatpush1.msra.mxu0 %v122
    %180 = vmatprep.subr.mxu0 0.0
    %181 = vmatpush1.msra.mxu0 %v121
    %182 = vmatprep.subr.mxu0 0.0
    %183 = vmatpush1.msra.mxu0 %v120
    %184 = vmatprep.subr.mxu0 0.0
    %185 = vmatpush2.msra.mxu0 0.0
    %186 = vmatprep.subr.mxu0 0.0
    %187 = vmatpush2.msra.mxu0 0.0
    %188 = vmatprep.subr.mxu0 0.0
    %189 = vmatpush2.msra.mxu0 0.0
    %190 = vmatprep.subr.mxu0 0.0
    %191 = vmatpush2.msra.mxu0 0.0
    %192 = vmatprep.subr.mxu0 0.0
    %193 = vmatpush2.msra.mxu0 0.0
    %194 = vmatprep.subr.mxu0 0.0
    %195 = vmatpush2.msra.mxu0 0.0
    %196 = vmatprep.subr.mxu0 0.0
    %197 = vmatpush2.msra.mxu0 0.0
    %198 = vmatprep.subr.mxu0 0.0
    %199 = vmatpush2.msra.mxu0 0.0
    %200 = vmatprep.subr.mxu0 0.0
    %201 = vmatpush2.msra.mxu0 0.0
    %202 = vmatprep.subr.mxu0 0.0
    %203 = vmatpush2.msra.mxu0 0.0
    %204 = vmatprep.subr.mxu0 0.0
    %205 = vmatpush2.msra.mxu0 0.0
    %206 = vmatprep.subr.mxu0 0.0
    %207 = vmatpush2.msra.mxu0 0.0
    %208 = vmatprep.subr.mxu0 0.0
    %209 = vmatpush2.msra.mxu0 0.0
    %210 = vmatprep.subr.mxu0 0.0
    %211 = vmatpush2.msra.mxu0 0.0
    %212 = vmatprep.subr.mxu0 0.0
    %213 = vmatpush2.msra.mxu0 0.0
    %214 = vmatprep.subr.mxu0 0.0
    %215 = vmatpush2.msra.mxu0 0.0
    %216 = vmatprep.mubr.f32.mxu0 0.0
    %217 = vmatmul.mubr.f32.gmra.mxu0 %v119
    %v218 = vpop.f32.mrf.mxu0
    %v219 = vadd.f32 0.0, %v218
    %v220 = vpop.f32.mrf.mxu0
    %221 = vdwg.mxu0
    %222 = vmatprep.subr.mxu0 0.0
    %223 = vmatpush1.msra.mxu0 %v151
    %224 = vmatprep.subr.mxu0 0.0
    %225 = vmatpush1.msra.mxu0 %v150
    %226 = vmatprep.subr.mxu0 0.0
    %227 = vmatpush1.msra.mxu0 %v149
    %228 = vmatprep.subr.mxu0 0.0
    %229 = vmatpush1.msra.mxu0 %v148
    %230 = vmatprep.subr.mxu0 0.0
    %231 = vmatpush1.msra.mxu0 %v147
    %232 = vmatprep.subr.mxu0 0.0
    %233 = vmatpush1.msra.mxu0 %v146
    %234 = vmatprep.subr.mxu0 0.0
    %235 = vmatpush1.msra.mxu0 %v145
    %236 = vmatprep.subr.mxu0 0.0
    %237 = vmatpush1.msra.mxu0 %v144
    %238 = vmatprep.subr.mxu0 0.0
    %239 = vmatpush1.msra.mxu0 %v143
    %240 = vmatprep.subr.mxu0 0.0
    %241 = vmatpush1.msra.mxu0 %v142
    %242 = vmatprep.subr.mxu0 0.0
    %243 = vmatpush1.msra.mxu0 %v141
    %244 = vmatprep.subr.mxu0 0.0
    %245 = vmatpush1.msra.mxu0 %v140
    %246 = vmatprep.subr.mxu0 0.0
    %247 = vmatpush1.msra.mxu0 %v139
    %248 = vmatprep.subr.mxu0 0.0
    %249 = vmatpush1.msra.mxu0 %v138
    %250 = vmatprep.subr.mxu0 0.0
    %251 = vmatpush1.msra.mxu0 %v137
    %252 = vmatprep.subr.mxu0 0.0
    %253 = vmatpush1.msra.mxu0 %v136
    %254 = vmatprep.subr.mxu0 0.0
    %255 = vmatpush2.msra.mxu0 0.0
    %256 = vmatprep.subr.mxu0 0.0
    %257 = vmatpush2.msra.mxu0 0.0
    %258 = vmatprep.subr.mxu0 0.0
    %259 = vmatpush2.msra.mxu0 0.0
    %260 = vmatprep.subr.mxu0 0.0
    %261 = vmatpush2.msra.mxu0 0.0
    %262 = vmatprep.subr.mxu0 0.0
    %263 = vmatpush2.msra.mxu0 0.0
    %264 = vmatprep.subr.mxu0 0.0
    %265 = vmatpush2.msra.mxu0 0.0
    %266 = vmatprep.subr.mxu0 0.0
    %267 = vmatpush2.msra.mxu0 0.0
    %268 = vmatprep.subr.mxu0 0.0
    %269 = vmatpush2.msra.mxu0 0.0
    %270 = vmatprep.subr.mxu0 0.0
    %271 = vmatpush2.msra.mxu0 0.0
    %272 = vmatprep.subr.mxu0 0.0
    %273 = vmatpush2.msra.mxu0 0.0
    %274 = vmatprep.subr.mxu0 0.0
    %275 = vmatpush2.msra.mxu0 0.0
    %276 = vmatprep.subr.mxu0 0.0
    %277 = vmatpush2.msra.mxu0 0.0
    %278 = vmatprep.subr.mxu0 0.0
    %279 = vmatpush2.msra.mxu0 0.0
    %280 = vmatprep.subr.mxu0 0.0
    %281 = vmatpush2.msra.mxu0 0.0
    %282 = vmatprep.subr.mxu0 0.0
    %283 = vmatpush2.msra.mxu0 0.0
    %284 = vmatprep.subr.mxu0 0.0
    %285 = vmatpush2.msra.mxu0 0.0
    %286 = vmatprep.mubr.f32.mxu0 0.0
    %287 = vmatmul.mubr.f32.gmra.mxu0 %v119
    %v288 = vpop.f32.mrf.mxu0
    %v289 = vadd.f32 0.0, %v288
    %v290 = vpop.f32.mrf.mxu0
    %291 = vdwg.mxu0
    %v292 = vmax.f32 %v219, %v289
    %v293 = vld [vmem:[%s5] sm:$0xff]
    %v294 = vld [vmem:[%s5 + $0x8] sm:$0xff]
    %v295 = vld [vmem:[%s5 + $0x10] sm:$0xff]
    %v296 = vld [vmem:[%s5 + $0x18] sm:$0xff]
    %v297 = vld [vmem:[%s5 + $0x20] sm:$0xff]
    %v298 = vld [vmem:[%s5 + $0x28] sm:$0xff]
    %v299 = vld [vmem:[%s5 + $0x30] sm:$0xff]
    %v300 = vld [vmem:[%s5 + $0x38] sm:$0xff]
    %v301 = vld [vmem:[%s6] sm:$0x1]
    %v303 = vlaneseq
    %v304 = vshrl.u32 %v303, 7
    %v305 = vsub.s32 0, %v304
    %v306 = vrot.slane %v301, %v305
    %vm308 = vcmask 523264
    %v310 = vsel %vm308, %v292, 0
    %312 = vmatprep.subr.mxu0 0.0
    %313 = vmatpush1.msra.mxu0 0.0
    %314 = vmatprep.subr.mxu0 0.0
    %315 = vmatpush1.msra.mxu0 0.0
    %316 = vmatprep.subr.mxu0 0.0
    %317 = vmatpush1.msra.mxu0 0.0
    %318 = vmatprep.subr.mxu0 0.0
    %319 = vmatpush1.msra.mxu0 0.0
    %320 = vmatprep.subr.mxu0 0.0
    %321 = vmatpush1.msra.mxu0 0.0
    %322 = vmatprep.subr.mxu0 0.0
    %323 = vmatpush1.msra.mxu0 0.0
    %324 = vmatprep.subr.mxu0 0.0
    %325 = vmatpush1.msra.mxu0 0.0
    %326 = vmatprep.subr.mxu0 0.0
    %327 = vmatpush1.msra.mxu0 0.0
    %328 = vmatprep.subr.mxu0 0.0
    %329 = vmatpush1.msra.mxu0 %v300
    %330 = vmatprep.subr.mxu0 0.0
    %331 = vmatpush1.msra.mxu0 %v299
    %332 = vmatprep.subr.mxu0 0.0
    %333 = vmatpush1.msra.mxu0 %v298
    %334 = vmatprep.subr.mxu0 0.0
    %335 = vmatpush1.msra.mxu0 %v297
    %336 = vmatprep.subr.mxu0 0.0
    %337 = vmatpush1.msra.mxu0 %v296
    %338 = vmatprep.subr.mxu0 0.0
    %339 = vmatpush1.msra.mxu0 %v295
    %340 = vmatprep.subr.mxu0 0.0
    %341 = vmatpush1.msra.mxu0 %v294
    %342 = vmatprep.subr.mxu0 0.0
    %343 = vmatpush1.msra.mxu0 %v293
    %344 = vmatprep.subr.mxu0 0.0
    %345 = vmatpush2.msra.mxu0 0.0
    %346 = vmatprep.subr.mxu0 0.0
    %347 = vmatpush2.msra.mxu0 0.0
    %348 = vmatprep.subr.mxu0 0.0
    %349 = vmatpush2.msra.mxu0 0.0
    %350 = vmatprep.subr.mxu0 0.0
    %351 = vmatpush2.msra.mxu0 0.0
    %352 = vmatprep.subr.mxu0 0.0
    %353 = vmatpush2.msra.mxu0 0.0
    %354 = vmatprep.subr.mxu0 0.0
    %355 = vmatpush2.msra.mxu0 0.0
    %356 = vmatprep.subr.mxu0 0.0
    %357 = vmatpush2.msra.mxu0 0.0
    %358 = vmatprep.subr.mxu0 0.0
    %359 = vmatpush2.msra.mxu0 0.0
    %360 = vmatprep.subr.mxu0 0.0
    %361 = vmatpush2.msra.mxu0 0.0
    %362 = vmatprep.subr.mxu0 0.0
    %363 = vmatpush2.msra.mxu0 0.0
    %364 = vmatprep.subr.mxu0 0.0
    %365 = vmatpush2.msra.mxu0 0.0
    %366 = vmatprep.subr.mxu0 0.0
    %367 = vmatpush2.msra.mxu0 0.0
    %368 = vmatprep.subr.mxu0 0.0
    %369 = vmatpush2.msra.mxu0 0.0
    %370 = vmatprep.subr.mxu0 0.0
    %371 = vmatpush2.msra.mxu0 0.0
    %372 = vmatprep.subr.mxu0 0.0
    %373 = vmatpush2.msra.mxu0 0.0
    %374 = vmatprep.subr.mxu0 0.0
    %375 = vmatpush2.msra.mxu0 0.0
    %376 = vmatprep.mubr.f32.mxu0 0.0
    %377 = vmatmul.mubr.f32.gmra.mxu0 %v310
    %v378 = vpop.f32.mrf.mxu0
    %v379 = vadd.f32 %v306, %v378
    %v380 = vpop.f32.mrf.mxu0
    %381 = vdwg.mxu0
    %v382 = vmax.f32 %v379, 0.0
    %v383 = vld [vmem:[%s7] sm:$0xff]
    %v384 = vld [vmem:[%s7 + $0x8] sm:$0xff]
    %v385 = vld [vmem:[%s7 + $0x10] sm:$0xff]
    %v386 = vld [vmem:[%s7 + $0x18] sm:$0xff]
    %v387 = vld [vmem:[%s7 + $0x20] sm:$0xff]
    %v388 = vld [vmem:[%s7 + $0x28] sm:$0xff]
    %v389 = vld [vmem:[%s7 + $0x30] sm:$0xff]
    %v390 = vld [vmem:[%s7 + $0x38] sm:$0xff]
    %v391 = vld [vmem:[%s7 + $0x40] sm:$0xff]
    %v392 = vld [vmem:[%s7 + $0x48] sm:$0xff]
    %v393 = vld [vmem:[%s7 + $0x50] sm:$0xff]
    %v394 = vld [vmem:[%s7 + $0x58] sm:$0xff]
    %v395 = vld [vmem:[%s7 + $0x60] sm:$0xff]
    %v396 = vld [vmem:[%s7 + $0x68] sm:$0xff]
    %v397 = vld [vmem:[%s7 + $0x70] sm:$0xff]
    %v398 = vld [vmem:[%s7 + $0x78] sm:$0xff]
    %v399 = vld [vmem:[%s8] sm:$0x1]
    %v401 = vlaneseq
    %v402 = vshrl.u32 %v401, 7
    %v403 = vsub.s32 0, %v402
    %v404 = vrot.slane %v399, %v403
    %406 = vmatprep.subr.mxu0 0.0
    %407 = vmatpush1.msra.mxu0 %v398
    %408 = vmatprep.subr.mxu0 0.0
    %409 = vmatpush1.msra.mxu0 %v397
    %410 = vmatprep.subr.mxu0 0.0
    %411 = vmatpush1.msra.mxu0 %v396
    %412 = vmatprep.subr.mxu0 0.0
    %413 = vmatpush1.msra.mxu0 %v395
    %414 = vmatprep.subr.mxu0 0.0
    %415 = vmatpush1.msra.mxu0 %v394
    %416 = vmatprep.subr.mxu0 0.0
    %417 = vmatpush1.msra.mxu0 %v393
    %418 = vmatprep.subr.mxu0 0.0
    %419 = vmatpush1.msra.mxu0 %v392
    %420 = vmatprep.subr.mxu0 0.0
    %421 = vmatpush1.msra.mxu0 %v391
    %422 = vmatprep.subr.mxu0 0.0
    %423 = vmatpush1.msra.mxu0 %v390
    %424 = vmatprep.subr.mxu0 0.0
    %425 = vmatpush1.msra.mxu0 %v389
    %426 = vmatprep.subr.mxu0 0.0
    %427 = vmatpush1.msra.mxu0 %v388
    %428 = vmatprep.subr.mxu0 0.0
    %429 = vmatpush1.msra.mxu0 %v387
    %430 = vmatprep.subr.mxu0 0.0
    %431 = vmatpush1.msra.mxu0 %v386
    %432 = vmatprep.subr.mxu0 0.0
    %433 = vmatpush1.msra.mxu0 %v385
    %434 = vmatprep.subr.mxu0 0.0
    %435 = vmatpush1.msra.mxu0 %v384
    %436 = vmatprep.subr.mxu0 0.0
    %437 = vmatpush1.msra.mxu0 %v383
    %438 = vmatprep.subr.mxu0 0.0
    %439 = vmatpush2.msra.mxu0 0.0
    %440 = vmatprep.subr.mxu0 0.0
    %441 = vmatpush2.msra.mxu0 0.0
    %442 = vmatprep.subr.mxu0 0.0
    %443 = vmatpush2.msra.mxu0 0.0
    %444 = vmatprep.subr.mxu0 0.0
    %445 = vmatpush2.msra.mxu0 0.0
    %446 = vmatprep.subr.mxu0 0.0
    %447 = vmatpush2.msra.mxu0 0.0
    %448 = vmatprep.subr.mxu0 0.0
    %449 = vmatpush2.msra.mxu0 0.0
    %450 = vmatprep.subr.mxu0 0.0
    %451 = vmatpush2.msra.mxu0 0.0
    %452 = vmatprep.subr.mxu0 0.0
    %453 = vmatpush2.msra.mxu0 0.0
    %454 = vmatprep.subr.mxu0 0.0
    %455 = vmatpush2.msra.mxu0 0.0
    %456 = vmatprep.subr.mxu0 0.0
    %457 = vmatpush2.msra.mxu0 0.0
    %458 = vmatprep.subr.mxu0 0.0
    %459 = vmatpush2.msra.mxu0 0.0
    %460 = vmatprep.subr.mxu0 0.0
    %461 = vmatpush2.msra.mxu0 0.0
    %462 = vmatprep.subr.mxu0 0.0
    %463 = vmatpush2.msra.mxu0 0.0
    %464 = vmatprep.subr.mxu0 0.0
    %465 = vmatpush2.msra.mxu0 0.0
    %466 = vmatprep.subr.mxu0 0.0
    %467 = vmatpush2.msra.mxu0 0.0
    %468 = vmatprep.subr.mxu0 0.0
    %469 = vmatpush2.msra.mxu0 0.0
    %470 = vmatprep.mubr.f32.mxu0 0.0
    %471 = vmatmul.mubr.f32.gmra.mxu0 %v382
    %v472 = vpop.f32.mrf.mxu0
    %v473 = vadd.f32 %v404, %v472
    %v474 = vpop.f32.mrf.mxu0
    %475 = vdwg.mxu0
    %vm476 = vcmask 74752
    %v477 = vsel %vm476, %v473, -inf
    %478 = vmax.xlane.f32.xlu0 %v477
    %v479 = vpop.xlane.xlu0 %478
    %v480 = vsub.f32 %v473, %v479
    %v481 = vmul.f32 %v480, 1.442695
    %v482 = vpow.pop %v481
    %v483 = vsel %vm476, %v482, 0.0
    %484 = vadd.xlane.f32.xlu0 %v483
    %v485 = vpop.xlane.xlu0 %484
    %v486 = vlog2.pop %v485
    %v487 = vmul.f32 %v486, 0.6931472
    %v488 = vsub.f32 %v480, %v487
    %489 = vst.msk [vmem:[#allocation2] sm:$0x3] %vm476, %v488
    // Predicated region
    $region38: #{tpu_custom_call.1} parent=1 // pred_check
      _
    $region39: #{tpu_custom_call.1} parent=1 // pred_check_branch
      %491 = sbr.rel (0) target = $region41
    $region40: #{tpu_custom_call.1} parent=1 // pred_region
      %s493 = ssub.s32 32, 32
      %494 = vsyncadd [#allocation3], %s493
      %s496 = sshll.u32 [#allocation2], 4
      %s497 = int_to_ptr.vmem [resolvable:$true] %s496
      %499 = dma.vmem_to_hbm [thread:$0]  %s497, 32, %s9, [#allocation3]
    $region41: #{tpu_custom_call.1} parent=1 // pred_fallthru
      _
    // Predicated region
    $region42: #{tpu_custom_call.1} parent=1 // pred_check
      _
    $region43: #{tpu_custom_call.1} parent=1 // pred_check_branch
      %501 = sbr.rel (0) target = $region45
    $region44: #{tpu_custom_call.1} parent=1 // pred_region
      %502 = dma.done [#allocation3], 32
    $region45: #{tpu_custom_call.1} parent=1 // pred_fallthru
      _
    %503 = vsyncpa [#allocation3], 1

</llo_original>
